<compile_context>
chip_gen: v6e
topology: v6e:2x2x1
jax: 0.10.0
libtpu: 0.0.40
codegen_flags: <defaults>
</compile_context>

<pallas_src>
import math

import jax
import jax.numpy as jnp
from jax.experimental import pallas as pl
from jax.experimental.pallas import tpu as pltpu


def _round_up(x, m):
    return ((x + m - 1) // m) * m


def _vmem_capacity_bytes():
    """Generation-aware VMEM capacity; falls back to the conservative 64 MiB."""
    try:
        return int(pltpu.get_tpu_info().vmem_capacity_bytes)
    except Exception:
        return 64 * 1024 * 1024


def projector_kernel(x_ref, w1_ref, b1_ref, w2_ref, b2_ref, o_ref):
    # x_ref : (TB, nin)          VMEM (pipelined per grid step)
    # w1_ref: (nin, nhid_p)      VMEM (resident, single-buffered)
    # b1_ref: (1, nhid_p)        VMEM (resident, single-buffered)
    # w2_ref: (nhid_p, nout_p)   VMEM (resident, single-buffered)
    # b2_ref: (1, nout_p)        VMEM (resident, single-buffered)
    # o_ref : (TB, nout_p)       VMEM
    x = x_ref[...]
    # First matmul on the MXU with f32 accumulation; bias + ReLU on the VPU in f32.
    h = jnp.dot(x, w1_ref[...], preferred_element_type=jnp.float32)
    h = h + b1_ref[...].astype(jnp.float32)
    h = jnp.maximum(h, 0.0)
    # Cast the intermediate to the weight dtype so a bf16 model uses the fast
    # bf16 MXU path on the second matmul; accumulation remains f32.
    h = h.astype(w2_ref.dtype)
    out = jnp.dot(h, w2_ref[...], preferred_element_type=jnp.float32)
    out = out + b2_ref[...].astype(jnp.float32)
    o_ref[...] = out.astype(o_ref.dtype)


def prepare_projector_params(w1, b1, w2, b2):
    """One-time parameter prep, hoisted out of the per-call hot path.

    * pads nhid and nout up to multiples of 128 (lane-dense intermediate and
      unmasked full-lane output stores); zero padding is numerically inert.
    * reshapes biases to (1, n) rows for in-kernel broadcast.

    Returns (w1_p, b1_p, w2_p, b2_p, nout) to pass to projector_forward.
    """
    nin, nhid = w1.shape
    nhid_w, nout = w2.shape
    assert nhid_w == nhid and b1.shape == (nhid,) and b2.shape == (nout,)

    nhid_p = _round_up(nhid, 128)
    nout_p = _round_up(nout, 128)
    if nhid_p != nhid:
        w1 = jnp.pad(w1, ((0, 0), (0, nhid_p - nhid)))
        b1 = jnp.pad(b1, ((0, nhid_p - nhid),))
        w2 = jnp.pad(w2, ((0, nhid_p - nhid), (0, 0)))
    if nout_p != nout:
        w2 = jnp.pad(w2, ((0, 0), (0, nout_p - nout)))
        b2 = jnp.pad(b2, ((0, nout_p - nout),))
    return w1, b1.reshape(1, nhid_p), w2, b2.reshape(1, nout_p), nout


def projector_forward(x, params, *, block_b=512):
    """Fused MLP forward: relu(x @ w1 + b1) @ w2 + b2.

    x:      (B, nin)
    params: output of prepare_projector_params (padded weights + original nout)
    """
    w1, b1, w2, b2, nout = params
    B, nin = x.shape
    nin_w, nhid_p = w1.shape
    nhid_w, nout_p = w2.shape
    assert nin_w == nin and nhid_w == nhid_p

    x_item = jnp.dtype(x.dtype).itemsize
    w_item = jnp.dtype(w1.dtype).itemsize

    # --- Batch tile selection -------------------------------------------------
    b_aligned = _round_up(B, 16)          # 16 is safe for f32 and bf16 sublanes
    tb = min(block_b, b_aligned)
    # Give the grid at least 2 steps whenever 2 minimum tiles of batch exist,
    # so both v7x TensorCores get work under dimension_semantics=("parallel",).
    if b_aligned >= 32:
        tb = min(tb, _round_up((b_aligned + 1) // 2, 16))

    def _align_tile(t):
        if t >= 256:
            return (t // 256) * 256       # fill the 256-wide MXU M dim (v6e/v7x)
        if t >= 128:
            return (t // 128) * 128       # enough to fill v5e's 4x128^2 MXU
        return max(16, (t // 16) * 16)

    tb = _align_tile(tb)

    # --- Exact VMEM budget (includes the in-kernel intermediates) -------------
    capacity = _vmem_capacity_bytes()
    cap_budget = max(capacity - (8 << 20), 16 << 20)  # headroom for Mosaic scratch

    def _vmem_needed(t):
        # Resident weights + biases (biases occupy >= 8 sublanes in VMEM).
        weights = (nin * nhid_p + 8 * nhid_p + nhid_p * nout_p + 8 * nout_p) * w_item
        # x / out tiles are double-buffered by the pipeline.
        io_tiles = 2 * t * nin * x_item + 2 * t * nout_p * x_item
        # In-kernel intermediates: f32 h, its low-precision cast copy (when the
        # weights are not f32), and the f32 pre-cast output accumulator.
        h_f32 = t * nhid_p * 4
        h_cast = t * nhid_p * w_item if w_item != 4 else 0
        out_f32 = t * nout_p * 4
        return weights + io_tiles + h_f32 + h_cast + out_f32

    while tb > 16 and _vmem_needed(tb) > cap_budget:
        tb = _align_tile(max(16, tb // 2))
    # TODO(synk): for extremely large nhid where the resident weights alone blow
    # the per-core VMEM budget (notably v7x's 64 MiB), split nhid inside the
    # kernel (chunked h / matching w2 rows accumulated into an f32 out scratch)
    # instead of only shrinking the batch tile.

    vmem_limit = int(min(capacity, max(_vmem_needed(tb) + (2 << 20), 8 << 20)))

    b_pad = _round_up(B, tb)
    if b_pad != B:
        x = jnp.pad(x, ((0, b_pad - B), (0, 0)))
    grid = (b_pad // tb,)

    cost = pl.CostEstimate(
        flops=int(2 * b_pad * (nin * nhid_p + nhid_p * nout_p)),
        transcendentals=0,
        bytes_accessed=int(
            b_pad * nin * x_item
            + (nin * nhid_p + nhid_p + nhid_p * nout_p + nout_p) * w_item
            + b_pad * nout_p * x_item
        ),
    )

    out = pl.pallas_call(
        projector_kernel,
        out_shape=jax.ShapeDtypeStruct((b_pad, nout_p), x.dtype),
        grid_spec=pltpu.PrefetchScalarGridSpec(
            num_scalar_prefetch=0,
            grid=grid,
            in_specs=[
                # x: one batch tile per grid step (auto double-buffered).
                pl.BlockSpec((tb, nin), lambda i: (i, 0)),
                # Weights / biases: constant block index -> fetched once and
                # resident; single-buffered (double-buffering an invariant
                # block is wasted VMEM).
                pl.BlockSpec((nin, nhid_p), lambda i: (0, 0),
                             pipeline_mode=pl.Buffered(1)),
                pl.BlockSpec((1, nhid_p), lambda i: (0, 0),
                             pipeline_mode=pl.Buffered(1)),
                pl.BlockSpec((nhid_p, nout_p), lambda i: (0, 0),
                             pipeline_mode=pl.Buffered(1)),
                pl.BlockSpec((1, nout_p), lambda i: (0, 0),
                             pipeline_mode=pl.Buffered(1)),
            ],
            out_specs=pl.BlockSpec((tb, nout_p), lambda i: (i, 0)),
        ),
        compiler_params=pltpu.CompilerParams(
            # Batch tiles are independent -> shard grid steps across both
            # TensorCores on v7x (no-op on single-TC v5e/v6e).
            dimension_semantics=("parallel",),
            vmem_limit_bytes=vmem_limit,
        ),
        cost_estimate=cost,
    )(x, w1, b1, w2, b2)

    # Strip batch padding and lane padding.
    return out[:B, :nout]


def init_projector_params(key, nin, nhid, nout, dtype=jnp.float32):
    """Xavier-normal (gain=1.414) weights, zero biases — matches reset_parameter()."""
    gain = 1.414
    k1, k2 = jax.random.split(key)
    std1 = gain * math.sqrt(2.0 / (nin + nhid))
    std2 = gain * math.sqrt(2.0 / (nhid + nout))
    # PyTorch Linear weight is (out, in); we store the transpose (in, out) for x @ W.
    w1 = (jax.random.normal(k1, (nin, nhid), dtype=jnp.float32) * std1).astype(dtype)
    w2 = (jax.random.normal(k2, (nhid, nout), dtype=jnp.float32) * std2).astype(dtype)
    b1 = jnp.zeros((nhid,), dtype=dtype)
    b2 = jnp.zeros((nout,), dtype=dtype)
    return w1, b1, w2, b2


if __name__ == "__main__":
    nin, nhid, nout = 32, 64, 16
    batch = 8

    key = jax.random.PRNGKey(0)
    kx, kp = jax.random.split(key)

    x = jax.random.normal(kx, (batch, nin), dtype=jnp.float32)
    w1, b1, w2, b2 = init_projector_params(kp, nin, nhid, nout)

    # One-time parameter prep (padding hoisted out of the forward hot path).
    params = prepare_projector_params(w1, b1, w2, b2)

    # --- f32 check -----------------------------------------------------------
    out = jax.block_until_ready(projector_forward(x, params))
    ref = jnp.maximum(x @ w1 + b1, 0.0) @ w2 + b2
    assert out.shape == (batch, nout)
    assert jnp.allclose(out, ref, atol=1e-5, rtol=1e-5), "f32 mismatch vs reference"

    # --- bf16 check (second matmul uses bf16 operands on the MXU, f32 accum) --
    xb = x.astype(jnp.bfloat16)
    w1b, b1b, w2b, b2b = (t.astype(jnp.bfloat16) for t in (w1, b1, w2, b2))
    params_b = prepare_projector_params(w1b, b1b, w2b, b2b)
    out_b = jax.block_until_ready(projector_forward(xb, params_b))
    hb = jnp.maximum(
        jnp.dot(xb, w1b, preferred_element_type=jnp.float32)
        + b1b.astype(jnp.float32),
        0.0,
    ).astype(jnp.bfloat16)
    ref_b = (
        jnp.dot(hb, w2b, preferred_element_type=jnp.float32)
        + b2b.astype(jnp.float32)
    ).astype(jnp.bfloat16)
    assert out_b.shape == (batch, nout)
    assert jnp.allclose(
        out_b.astype(jnp.float32), ref_b.astype(jnp.float32), atol=2e-2, rtol=2e-2
    ), "bf16 mismatch vs reference"

    print("KERNEL_OK")
</pallas_src>

<mosaic_0001>
module attributes {stable_mosaic.version = 11 : i64} {
  func.func @projector_kernel(%arg0: i32, %arg1: memref<16x32xf32, #tpu.memory_space<vmem>>, %arg2: memref<32x128xf32, #tpu.memory_space<vmem>>, %arg3: memref<1x128xf32, #tpu.memory_space<vmem>>, %arg4: memref<128x128xf32, #tpu.memory_space<vmem>>, %arg5: memref<1x128xf32, #tpu.memory_space<vmem>>, %arg6: memref<16x128xf32, #tpu.memory_space<vmem>>) attributes {dimension_semantics = [#tpu.dimension_semantics<parallel>], iteration_bounds = array<i64: 1>, scalar_prefetch = 0 : i64, scratch_operands = 0 : i64, tpu.core_type = #tpu.core_type<tc>, window_params = [{transform_indices = @transform_0, window_bounds = array<i64: 16, 32>}, {pipeline_mode = #tpu.pipeline_mode<synchronous>, transform_indices = @transform_1, window_bounds = array<i64: 32, 128>}, {pipeline_mode = #tpu.pipeline_mode<synchronous>, transform_indices = @transform_2, window_bounds = array<i64: 1, 128>}, {pipeline_mode = #tpu.pipeline_mode<synchronous>, transform_indices = @transform_3, window_bounds = array<i64: 128, 128>}, {pipeline_mode = #tpu.pipeline_mode<synchronous>, transform_indices = @transform_4, window_bounds = array<i64: 1, 128>}, {transform_indices = @transform_5, window_bounds = array<i64: 16, 128>}]} {
    %c0 = arith.constant 0 : index
    %c0_0 = arith.constant 0 : index
    %0 = vector.load %arg1[%c0, %c0_0] : memref<16x32xf32, #tpu.memory_space<vmem>>, vector<16x32xf32>
    %c0_1 = arith.constant 0 : index
    %c0_2 = arith.constant 0 : index
    %1 = vector.load %arg2[%c0_1, %c0_2] : memref<32x128xf32, #tpu.memory_space<vmem>>, vector<32x128xf32>
    %cst = arith.constant dense<0.000000e+00> : vector<16x128xf32>
    %2 = tpu.matmul %0, %1, %cst {dimension_numbers = #tpu.dot_dimension_numbers<[1], [0], [0], [1], [0, 0, 1, 1], [], []>} : vector<16x32xf32>, vector<32x128xf32>, vector<16x128xf32> -> vector<16x128xf32>
    %c0_3 = arith.constant 0 : index
    %c0_4 = arith.constant 0 : index
    %3 = vector.load %arg3[%c0_3, %c0_4] : memref<1x128xf32, #tpu.memory_space<vmem>>, vector<1x128xf32>
    %4 = vector.broadcast %3 : vector<1x128xf32> to vector<16x128xf32>
    %5 = arith.addf %2, %4 : vector<16x128xf32>
    %cst_5 = arith.constant 0.000000e+00 : f32
    %6 = vector.broadcast %cst_5 : f32 to vector<16x128xf32>
    %7 = arith.maximumf %5, %6 : vector<16x128xf32>
    %c0_6 = arith.constant 0 : index
    %c0_7 = arith.constant 0 : index
    %8 = vector.load %arg4[%c0_6, %c0_7] : memref<128x128xf32, #tpu.memory_space<vmem>>, vector<128x128xf32>
    %cst_8 = arith.constant dense<0.000000e+00> : vector<16x128xf32>
    %9 = tpu.matmul %7, %8, %cst_8 {dimension_numbers = #tpu.dot_dimension_numbers<[1], [0], [0], [1], [0, 0, 1, 1], [], []>} : vector<16x128xf32>, vector<128x128xf32>, vector<16x128xf32> -> vector<16x128xf32>
    %c0_9 = arith.constant 0 : index
    %c0_10 = arith.constant 0 : index
    %10 = vector.load %arg5[%c0_9, %c0_10] : memref<1x128xf32, #tpu.memory_space<vmem>>, vector<1x128xf32>
    %11 = vector.broadcast %10 : vector<1x128xf32> to vector<16x128xf32>
    %12 = arith.addf %9, %11 : vector<16x128xf32>
    %c0_11 = arith.constant 0 : index
    %c0_12 = arith.constant 0 : index
    %13 = vector.load %arg6[%c0_11, %c0_12] : memref<16x128xf32, #tpu.memory_space<vmem>>, vector<16x128xf32>
    tpu.vector_store %arg6[%c0_11, %c0_12], %12 {strides = array<i32>} : memref<16x128xf32, #tpu.memory_space<vmem>>, vector<16x128xf32>,
    return
  }
  func.func @transform_0(%arg0: i32) -> (i32, i32) {
    %c0_i32 = arith.constant 0 : i32
    %c0_i32_0 = arith.constant 0 : i32
    return %arg0, %c0_i32 : i32, i32
  }
  func.func @transform_1(%arg0: i32) -> (i32, i32) {
    %c0_i32 = arith.constant 0 : i32
    %c0_i32_0 = arith.constant 0 : i32
    %c0_i32_1 = arith.constant 0 : i32
    return %c0_i32, %c0_i32_0 : i32, i32
  }
  func.func @transform_2(%arg0: i32) -> (i32, i32) {
    %c0_i32 = arith.constant 0 : i32
    %c0_i32_0 = arith.constant 0 : i32
    %c0_i32_1 = arith.constant 0 : i32
    return %c0_i32, %c0_i32_0 : i32, i32
  }
  func.func @transform_3(%arg0: i32) -> (i32, i32) {
    %c0_i32 = arith.constant 0 : i32
    %c0_i32_0 = arith.constant 0 : i32
    %c0_i32_1 = arith.constant 0 : i32
    return %c0_i32, %c0_i32_0 : i32, i32
  }
  func.func @transform_4(%arg0: i32) -> (i32, i32) {
    %c0_i32 = arith.constant 0 : i32
    %c0_i32_0 = arith.constant 0 : i32
    %c0_i32_1 = arith.constant 0 : i32
    return %c0_i32, %c0_i32_0 : i32, i32
  }
  func.func @transform_5(%arg0: i32) -> (i32, i32) {
    %c0_i32 = arith.constant 0 : i32
    %c0_i32_0 = arith.constant 0 : i32
    return %arg0, %c0_i32 : i32, i32
  }
}

</mosaic_0001>

<llo_original>
// kernel: tpu_custom_call.1
$region0: #{tpu_custom_call.1}
  #allocation0 [shape = 'u32[]', space=smem, size = 0x4, offset = 0x4, fixed_abs, tag = 'smem constant byte address 0x4 - core index']
  #allocation1 [shape = 'u32[144,128]{1,0:T(1,128)}', space=vmem, size = 0x12000, scoped, tag = 'internal scratch']
  %s0 = inlined_call_operand.hbm [shape: f32[16,32], index: 0, kind: input, shape index: {}]
  %s1 = inlined_call_operand.hbm [shape: f32[32,128], index: 1, kind: input, shape index: {}]
  %s2 = inlined_call_operand.vmem [shape: f32[1,128], index: 2, kind: input, shape index: {}]
  %s3 = inlined_call_operand.hbm [shape: f32[128,128], index: 3, kind: input, shape index: {}]
  %s4 = inlined_call_operand.vmem [shape: f32[1,128], index: 4, kind: input, shape index: {}]
  %s5 = inlined_call_operand.hbm [shape: f32[16,128], index: 5, kind: output, shape index: {}]
  %s6 = sld [smem:[#allocation0]]
  $region42: #{tpu_custom_call.1} parent=0
    _
  %s8 = ssub.s32 1, %s6
  %s9 = scalar_select 0, %s8, %s6
  $region1: #{tpu_custom_call.1} parent=0
    #allocation2 [shape = 'u8[8192]{0}', space=vmem, size = 0x2000, scoped, tag = 'input window, operand 0, single buffered']
    #allocation3 [shape = 's32[1]{0}', space=sflag, size = 0x4, scoped, tag = 'scoped memory for tpu_custom_call.1']
    #allocation4 [shape = 's32[1]{0}', space=sflag, size = 0x4, scoped, tag = 'scoped memory for tpu_custom_call.1']
    #allocation5 [shape = 'u8[16384]{0}', space=vmem, size = 0x4000, scoped, tag = 'input window, operand 1, single buffered']
    #allocation6 [shape = 's32[1]{0}', space=sflag, size = 0x4, scoped, tag = 'scoped memory for tpu_custom_call.1']
    #allocation7 [shape = 'u8[65536]{0}', space=vmem, size = 0x10000, scoped, tag = 'input window, operand 3, single buffered']
    #allocation8 [shape = 'u8[8192]{0}', space=vmem, size = 0x2000, scoped, tag = 'output window, operand 0, single buffered']
    %10 = vsyncpa [#allocation3], 0
    %11 = vsyncpa [#allocation6], 0
    %12 = vsyncpa [#allocation4], 0
    // Predicated region
    $region2: #{tpu_custom_call.1} parent=1 // pred_check
      _
    $region3: #{tpu_custom_call.1} parent=1 // pred_check_branch
      %14 = sbr.rel (0) target = $region5
    $region4: #{tpu_custom_call.1} parent=1 // pred_region
      %s16 = ssub.s32 256, 256
      %17 = vsyncadd [#allocation3], %s16
      %s18 = sshll.u32 [#allocation2], 4
      %s19 = int_to_ptr.vmem [resolvable:$true] %s18
      %24 = dma.hbm_to_vmem [thread:$0]  %s0, 256, %s19, [#allocation3], 128, 128, 8
    $region5: #{tpu_custom_call.1} parent=1 // pred_fallthru
      _
    // Predicated region
    $region6: #{tpu_custom_call.1} parent=1 // pred_check
      _
    $region7: #{tpu_custom_call.1} parent=1 // pred_check_branch
      %26 = sbr.rel (0) target = $region9
    $region8: #{tpu_custom_call.1} parent=1 // pred_region
      %s28 = ssub.s32 512, 512
      %29 = vsyncadd [#allocation6], %s28
      %s30 = sshll.u32 [#allocation5], 4
      %s31 = int_to_ptr.vmem [resolvable:$true] %s30
      %36 = dma.hbm_to_vmem [thread:$0]  %s1, 512, %s31, [#allocation6], 128, 128, 8
    $region9: #{tpu_custom_call.1} parent=1 // pred_fallthru
      _
    // Predicated region
    $region10: #{tpu_custom_call.1} parent=1 // pred_check
      _
    $region11: #{tpu_custom_call.1} parent=1 // pred_check_branch
      %38 = sbr.rel (0) target = $region13
    $region12: #{tpu_custom_call.1} parent=1 // pred_region
      _
    $region13: #{tpu_custom_call.1} parent=1 // pred_fallthru
      _
    // Predicated region
    $region14: #{tpu_custom_call.1} parent=1 // pred_check
      _
    $region15: #{tpu_custom_call.1} parent=1 // pred_check_branch
      %40 = sbr.rel (0) target = $region17
    $region16: #{tpu_custom_call.1} parent=1 // pred_region
      %s42 = ssub.s32 2048, 2048
      %43 = vsyncadd [#allocation6], %s42
      %s44 = sshll.u32 [#allocation7], 4
      %s45 = int_to_ptr.vmem [resolvable:$true] %s44
      %50 = dma.hbm_to_vmem [thread:$0]  %s3, 2048, %s45, [#allocation6], 128, 128, 8
    $region17: #{tpu_custom_call.1} parent=1 // pred_fallthru
      _
    // Predicated region
    $region18: #{tpu_custom_call.1} parent=1 // pred_check
      _
    $region19: #{tpu_custom_call.1} parent=1 // pred_check_branch
      %52 = sbr.rel (0) target = $region21
    $region20: #{tpu_custom_call.1} parent=1 // pred_region
      _
    $region21: #{tpu_custom_call.1} parent=1 // pred_fallthru
      _
    // Predicated region
    $region22: #{tpu_custom_call.1} parent=1 // pred_check
      _
    $region23: #{tpu_custom_call.1} parent=1 // pred_check_branch
      %54 = sbr.rel (0) target = $region25
    $region24: #{tpu_custom_call.1} parent=1 // pred_region
      %55 = dma.done [#allocation3], 256
    $region25: #{tpu_custom_call.1} parent=1 // pred_fallthru
      _
    // Predicated region
    $region26: #{tpu_custom_call.1} parent=1 // pred_check
      _
    $region27: #{tpu_custom_call.1} parent=1 // pred_check_branch
      %57 = sbr.rel (0) target = $region29
    $region28: #{tpu_custom_call.1} parent=1 // pred_region
      %58 = dma.done [#allocation6], 512
    $region29: #{tpu_custom_call.1} parent=1 // pred_fallthru
      _
    // Predicated region
    $region30: #{tpu_custom_call.1} parent=1 // pred_check
      _
    $region31: #{tpu_custom_call.1} parent=1 // pred_check_branch
      %60 = sbr.rel (0) target = $region33
    $region32: #{tpu_custom_call.1} parent=1 // pred_region
      %61 = dma.done [#allocation6], 2048
    $region33: #{tpu_custom_call.1} parent=1 // pred_fallthru
      _
    %v62 = vld [vmem:[#allocation2] sm:$0xff]
    %v63 = vld [vmem:[#allocation2 + $0x8] sm:$0xff]
    %v64 = vld [vmem:[#allocation5] sm:$0xff]
    %v65 = vld [vmem:[#allocation5 + $0x8] sm:$0xff]
    %v66 = vld [vmem:[#allocation5 + $0x10] sm:$0xff]
    %v67 = vld [vmem:[#allocation5 + $0x18] sm:$0xff]
    %v68 = vld [vmem:[%s2] sm:$0x1]
    %v70 = vlaneseq
    %v71 = vshrl.u32 %v70, 7
    %v72 = vsub.s32 0, %v71
    %v73 = vrot.slane %v68, %v72
    %vm75 = vcmask 261120
    %v77 = vsel %vm75, %v62, 0
    %v80 = vsel %vm75, %v63, 0
    %82 = vmatprep.subr.mxu0 0.0
    %83 = vmatpush1.msra.mxu0 0.0
    %84 = vmatprep.subr.mxu0 0.0
    %85 = vmatpush1.msra.mxu0 0.0
    %86 = vmatprep.subr.mxu0 0.0
    %87 = vmatpush1.msra.mxu0 0.0
    %88 = vmatprep.subr.mxu0 0.0
    %89 = vmatpush1.msra.mxu0 0.0
    %90 = vmatprep.subr.mxu0 0.0
    %91 = vmatpush1.msra.mxu0 0.0
    %92 = vmatprep.subr.mxu0 0.0
    %93 = vmatpush1.msra.mxu0 0.0
    %94 = vmatprep.subr.mxu0 0.0
    %95 = vmatpush1.msra.mxu0 0.0
    %96 = vmatprep.subr.mxu0 0.0
    %97 = vmatpush1.msra.mxu0 0.0
    %98 = vmatprep.subr.mxu0 0.0
    %99 = vmatpush1.msra.mxu0 0.0
    %100 = vmatprep.subr.mxu0 0.0
    %101 = vmatpush1.msra.mxu0 0.0
    %102 = vmatprep.subr.mxu0 0.0
    %103 = vmatpush1.msra.mxu0 0.0
    %104 = vmatprep.subr.mxu0 0.0
    %105 = vmatpush1.msra.mxu0 0.0
    %106 = vmatprep.subr.mxu0 0.0
    %107 = vmatpush1.msra.mxu0 %v67
    %108 = vmatprep.subr.mxu0 0.0
    %109 = vmatpush1.msra.mxu0 %v66
    %110 = vmatprep.subr.mxu0 0.0
    %111 = vmatpush1.msra.mxu0 %v65
    %112 = vmatprep.subr.mxu0 0.0
    %113 = vmatpush1.msra.mxu0 %v64
    %114 = vmatprep.subr.mxu0 0.0
    %115 = vmatpush2.msra.mxu0 0.0
    %116 = vmatprep.subr.mxu0 0.0
    %117 = vmatpush2.msra.mxu0 0.0
    %118 = vmatprep.subr.mxu0 0.0
    %119 = vmatpush2.msra.mxu0 0.0
    %120 = vmatprep.subr.mxu0 0.0
    %121 = vmatpush2.msra.mxu0 0.0
    %122 = vmatprep.subr.mxu0 0.0
    %123 = vmatpush2.msra.mxu0 0.0
    %124 = vmatprep.subr.mxu0 0.0
    %125 = vmatpush2.msra.mxu0 0.0
    %126 = vmatprep.subr.mxu0 0.0
    %127 = vmatpush2.msra.mxu0 0.0
    %128 = vmatprep.subr.mxu0 0.0
    %129 = vmatpush2.msra.mxu0 0.0
    %130 = vmatprep.subr.mxu0 0.0
    %131 = vmatpush2.msra.mxu0 0.0
    %132 = vmatprep.subr.mxu0 0.0
    %133 = vmatpush2.msra.mxu0 0.0
    %134 = vmatprep.subr.mxu0 0.0
    %135 = vmatpush2.msra.mxu0 0.0
    %136 = vmatprep.subr.mxu0 0.0
    %137 = vmatpush2.msra.mxu0 0.0
    %138 = vmatprep.subr.mxu0 0.0
    %139 = vmatpush2.msra.mxu0 0.0
    %140 = vmatprep.subr.mxu0 0.0
    %141 = vmatpush2.msra.mxu0 0.0
    %142 = vmatprep.subr.mxu0 0.0
    %143 = vmatpush2.msra.mxu0 0.0
    %144 = vmatprep.subr.mxu0 0.0
    %145 = vmatpush2.msra.mxu0 0.0
    %146 = vmatprep.mubr.f32.mxu0 0.0
    %147 = vmatmul.mubr.f32.gmra.mxu0 %v77
    %v148 = vpop.f32.mrf.mxu0
    %v149 = vadd.f32 %v73, %v148
    %v150 = vpop.f32.mrf.mxu0
    %151 = vmatprep.mubr.f32.mxu0 0.0
    %152 = vmatmul.mubr.f32.gmra.mxu0 %v80
    %v153 = vpop.f32.mrf.mxu0
    %v154 = vadd.f32 %v73, %v153
    %v155 = vpop.f32.mrf.mxu0
    %156 = vdwg.mxu0
    %v157 = vmax.f32 %v149, 0.0
    %v158 = vmax.f32 %v154, 0.0
    %v159 = vld [vmem:[#allocation7] sm:$0xff]
    %v160 = vld [vmem:[#allocation7 + $0x8] sm:$0xff]
    %v161 = vld [vmem:[#allocation7 + $0x10] sm:$0xff]
    %v162 = vld [vmem:[#allocation7 + $0x18] sm:$0xff]
    %v163 = vld [vmem:[#allocation7 + $0x20] sm:$0xff]
    %v164 = vld [vmem:[#allocation7 + $0x28] sm:$0xff]
    %v165 = vld [vmem:[#allocation7 + $0x30] sm:$0xff]
    %v166 = vld [vmem:[#allocation7 + $0x38] sm:$0xff]
    %v167 = vld [vmem:[#allocation7 + $0x40] sm:$0xff]
    %v168 = vld [vmem:[#allocation7 + $0x48] sm:$0xff]
    %v169 = vld [vmem:[#allocation7 + $0x50] sm:$0xff]
    %v170 = vld [vmem:[#allocation7 + $0x58] sm:$0xff]
    %v171 = vld [vmem:[#allocation7 + $0x60] sm:$0xff]
    %v172 = vld [vmem:[#allocation7 + $0x68] sm:$0xff]
    %v173 = vld [vmem:[#allocation7 + $0x70] sm:$0xff]
    %v174 = vld [vmem:[#allocation7 + $0x78] sm:$0xff]
    %v175 = vld [vmem:[%s4] sm:$0x1]
    %v177 = vlaneseq
    %v178 = vshrl.u32 %v177, 7
    %v179 = vsub.s32 0, %v178
    %v180 = vrot.slane %v175, %v179
    %182 = vmatprep.subr.mxu0 0.0
    %183 = vmatpush1.msra.mxu0 %v174
    %184 = vmatprep.subr.mxu0 0.0
    %185 = vmatpush1.msra.mxu0 %v173
    %186 = vmatprep.subr.mxu0 0.0
    %187 = vmatpush1.msra.mxu0 %v172
    %188 = vmatprep.subr.mxu0 0.0
    %189 = vmatpush1.msra.mxu0 %v171
    %190 = vmatprep.subr.mxu0 0.0
    %191 = vmatpush1.msra.mxu0 %v170
    %192 = vmatprep.subr.mxu0 0.0
    %193 = vmatpush1.msra.mxu0 %v169
    %194 = vmatprep.subr.mxu0 0.0
    %195 = vmatpush1.msra.mxu0 %v168
    %196 = vmatprep.subr.mxu0 0.0
    %197 = vmatpush1.msra.mxu0 %v167
    %198 = vmatprep.subr.mxu0 0.0
    %199 = vmatpush1.msra.mxu0 %v166
    %200 = vmatprep.subr.mxu0 0.0
    %201 = vmatpush1.msra.mxu0 %v165
    %202 = vmatprep.subr.mxu0 0.0
    %203 = vmatpush1.msra.mxu0 %v164
    %204 = vmatprep.subr.mxu0 0.0
    %205 = vmatpush1.msra.mxu0 %v163
    %206 = vmatprep.subr.mxu0 0.0
    %207 = vmatpush1.msra.mxu0 %v162
    %208 = vmatprep.subr.mxu0 0.0
    %209 = vmatpush1.msra.mxu0 %v161
    %210 = vmatprep.subr.mxu0 0.0
    %211 = vmatpush1.msra.mxu0 %v160
    %212 = vmatprep.subr.mxu0 0.0
    %213 = vmatpush1.msra.mxu0 %v159
    %214 = vmatprep.subr.mxu0 0.0
    %215 = vmatpush2.msra.mxu0 0.0
    %216 = vmatprep.subr.mxu0 0.0
    %217 = vmatpush2.msra.mxu0 0.0
    %218 = vmatprep.subr.mxu0 0.0
    %219 = vmatpush2.msra.mxu0 0.0
    %220 = vmatprep.subr.mxu0 0.0
    %221 = vmatpush2.msra.mxu0 0.0
    %222 = vmatprep.subr.mxu0 0.0
    %223 = vmatpush2.msra.mxu0 0.0
    %224 = vmatprep.subr.mxu0 0.0
    %225 = vmatpush2.msra.mxu0 0.0
    %226 = vmatprep.subr.mxu0 0.0
    %227 = vmatpush2.msra.mxu0 0.0
    %228 = vmatprep.subr.mxu0 0.0
    %229 = vmatpush2.msra.mxu0 0.0
    %230 = vmatprep.subr.mxu0 0.0
    %231 = vmatpush2.msra.mxu0 0.0
    %232 = vmatprep.subr.mxu0 0.0
    %233 = vmatpush2.msra.mxu0 0.0
    %234 = vmatprep.subr.mxu0 0.0
    %235 = vmatpush2.msra.mxu0 0.0
    %236 = vmatprep.subr.mxu0 0.0
    %237 = vmatpush2.msra.mxu0 0.0
    %238 = vmatprep.subr.mxu0 0.0
    %239 = vmatpush2.msra.mxu0 0.0
    %240 = vmatprep.subr.mxu0 0.0
    %241 = vmatpush2.msra.mxu0 0.0
    %242 = vmatprep.subr.mxu0 0.0
    %243 = vmatpush2.msra.mxu0 0.0
    %244 = vmatprep.subr.mxu0 0.0
    %245 = vmatpush2.msra.mxu0 0.0
    %246 = vmatprep.mubr.f32.mxu0 0.0
    %247 = vmatmul.mubr.f32.gmra.mxu0 %v157
    %v248 = vpop.f32.mrf.mxu0
    %v249 = vadd.f32 %v180, %v248
    %v250 = vpop.f32.mrf.mxu0
    %251 = vmatprep.mubr.f32.mxu0 0.0
    %252 = vmatmul.mubr.f32.gmra.mxu0 %v158
    %v253 = vpop.f32.mrf.mxu0
    %v254 = vadd.f32 %v180, %v253
    %v255 = vpop.f32.mrf.mxu0
    %256 = vdwg.mxu0
    %257 = vst [vmem:[#allocation8] sm:$0xff] %v249
    %258 = vst [vmem:[#allocation8 + $0x8] sm:$0xff] %v254
    // Predicated region
    $region34: #{tpu_custom_call.1} parent=1 // pred_check
      _
    $region35: #{tpu_custom_call.1} parent=1 // pred_check_branch
      %260 = sbr.rel (0) target = $region37
    $region36: #{tpu_custom_call.1} parent=1 // pred_region
      %s262 = ssub.s32 256, 256
      %263 = vsyncadd [#allocation4], %s262
      %s264 = sshll.u32 [#allocation8], 4
      %s265 = int_to_ptr.vmem [resolvable:$true] %s264
      %270 = dma.vmem_to_hbm [thread:$0]  %s265, 256, %s5, [#allocation4], 128, 128, 8
    $region37: #{tpu_custom_call.1} parent=1 // pred_fallthru
      _
    // Predicated region
    $region38: #{tpu_custom_call.1} parent=1 // pred_check
      _
    $region39: #{tpu_custom_call.1} parent=1 // pred_check_branch
      %272 = sbr.rel (0) target = $region41
    $region40: #{tpu_custom_call.1} parent=1 // pred_region
      %273 = dma.done [#allocation4], 256
    $region41: #{tpu_custom_call.1} parent=1 // pred_fallthru
      _
    %274 = vsyncpa [#allocation3], 1
    %275 = vsyncpa [#allocation6], 1
    %276 = vsyncpa [#allocation4], 1

</llo_original>
